<compile_context>
chip_gen: v7x
topology: tpu7x:2x2x1
jax: 0.10.0
libtpu: 0.0.40
codegen_flags: <defaults>
</compile_context>

<pallas_src>
import functools

import jax
import jax.numpy as jnp
from jax.experimental import pallas as pl
from jax.experimental.pallas import tpu as pltpu


def _round_up(v, m):
    return ((v + m - 1) // m) * m


def _combined_loss_kernel(x_ref, y_ref, pix_ref,
                          ce_ref, inter_ref, psum_ref, tsum_ref,
                          ce_acc, inter_acc, psum_acc, tsum_acc,
                          *, hw, tile, needs_mask):
    i = pl.program_id(1)

    # accumulators are re-initialized per batch slice (the batch axis is
    # "parallel": each core owns a disjoint set of n's, each with its own
    # i==0 ... i==last pixel sweep).
    @pl.when(i == 0)
    def _init():
        ce_acc[...] = jnp.zeros_like(ce_acc)
        inter_acc[...] = jnp.zeros_like(inter_acc)
        psum_acc[...] = jnp.zeros_like(psum_acc)
        tsum_acc[...] = jnp.zeros_like(tsum_acc)

    logits = x_ref[...].astype(jnp.float32)           # (C, tile)
    yv = y_ref[...]                                    # (1, tile) int32
    pix = pix_ref[...]                                 # (C, 1)  int32

    # one-hot built in-kernel straight from the raw target map: no wrapper
    # (N,H,W,C) pass and no class-index stream in HBM.  VPU filler.
    onehot = (yv == pix).astype(jnp.float32)           # (C, tile)

    if needs_mask:
        lane = jax.lax.broadcasted_iota(jnp.int32, (1, tile), 1)
        valid = (i * tile + lane) < hw                 # (1, tile) bool
        valid_f = valid.astype(jnp.float32)
        # zero padded-lane logits BEFORE exp (NaN/garbage padding is dropped
        # by the select, never propagated)
        logits = jnp.where(valid, logits, 0.0)
        onehot = onehot * valid_f

    # numerically-stable softmax over the class (sublane) axis
    m = jnp.max(logits, axis=0, keepdims=True)         # (1, tile)
    shifted = logits - m
    ex = jnp.exp(shifted)                              # EUP
    denom = jnp.sum(ex, axis=0, keepdims=True)         # (1, tile)
    inv = pl.reciprocal(denom, approx=True)            # EUP slot, not VALU
    probs = ex * inv                                   # (C, tile)
    if needs_mask:
        probs = probs * valid_f

    # CE without materializing a (C,tile) log_probs tensor:
    #   -sum_c onehot*(shifted - log(denom))
    #     = sum_c(onehot)*log(denom) - sum_c(onehot*shifted)
    hit_shift = jnp.sum(onehot * shifted, axis=0, keepdims=True)   # (1, tile)
    hit_cnt = jnp.sum(onehot, axis=0, keepdims=True)               # (1, tile)
    ce_acc[...] += hit_cnt * jnp.log(denom) - hit_shift

    inter_acc[...] += probs * onehot
    psum_acc[...] += probs
    # dice target counts: per-step lane reduce (XLU) into a tiny (C,1) acc so
    # v5e's single vector-store slot never sees a third (C,tile) stream.
    tsum_acc[...] += jnp.sum(onehot, axis=1, keepdims=True)

    @pl.when(i == pl.num_programs(1) - 1)
    def _finalize():
        ce_ref[...] = jnp.sum(ce_acc[...], axis=1, keepdims=True)
        inter_ref[...] = jnp.sum(inter_acc[...], axis=1, keepdims=True)
        psum_ref[...] = jnp.sum(psum_acc[...], axis=1, keepdims=True)
        tsum_ref[...] = tsum_acc[...]


def combined_loss(x, y, labels, labels_to_pixels,
                  weights=(0.5, 0.5), smooth=1e-6,
                  max_tile=65536, vmem_budget_bytes=20 * 1024 * 1024):
    """x: (N, C, H, W) float logits (f32 or bf16).  y: (N, H, W) int pixel map."""
    N, C, H, W = x.shape
    HW = H * W
    P = N * HW
    x_dsize = jnp.dtype(x.dtype).itemsize

    # class -> pixel-value column (tiny constant VMEM block)
    pix_col = jnp.asarray([labels_to_pixels[l] for l in labels],
                          dtype=jnp.int32).reshape(C, 1)

    x3 = x.reshape(N, C, HW)                  # free, contiguous reshape
    y3 = y.reshape(N, 1, HW).astype(jnp.int32)

    # ---- tile sizing: fill a conservative VMEM budget (v7x-safe) ----------
    # per-lane bytes, with f32 sublane padding to 8 rows accounted for:
    c_pad = _round_up(C, 8)
    bytes_per_lane = (2 * c_pad * x_dsize     # double-buffered logits blocks
                      + 2 * 8 * 4             # double-buffered int32 target row
                      + 8 * 4                 # ce accumulator
                      + 2 * c_pad * 4)        # inter + psum accumulators
    budget_tile = max(128, (vmem_budget_bytes // bytes_per_lane) // 128 * 128)
    tile = max(128, min(max_tile, budget_tile, _round_up(HW, 128)))
    tile = (tile // 128) * 128
    n_blk = pl.cdiv(HW, tile)
    needs_mask = (HW % tile) != 0

    kernel = functools.partial(_combined_loss_kernel,
                               hw=HW, tile=tile, needs_mask=needs_mask)

    cost = pl.CostEstimate(
        flops=10 * N * C * HW,
        transcendentals=N * HW * (C + 2),     # exp per class + log + reciprocal
        bytes_accessed=N * C * HW * x_dsize + N * HW * 4)

    ce_p, inter_p, psum_p, tsum_p = pl.pallas_call(
        kernel,
        out_shape=(
            jax.ShapeDtypeStruct((N, 1, 1), jnp.float32),   # per-batch CE sum
            jax.ShapeDtypeStruct((N, C, 1), jnp.float32),   # dice intersection
            jax.ShapeDtypeStruct((N, C, 1), jnp.float32),   # dice pred-sum
            jax.ShapeDtypeStruct((N, C, 1), jnp.float32),   # dice target count
        ),
        grid_spec=pltpu.PrefetchScalarGridSpec(
            num_scalar_prefetch=0,
            grid=(N, n_blk),
            in_specs=[
                pl.BlockSpec((pl.Squeezed(), C, tile), lambda n, i: (n, 0, i)),
                pl.BlockSpec((pl.Squeezed(), 1, tile), lambda n, i: (n, 0, i)),
                pl.BlockSpec((C, 1), lambda n, i: (0, 0)),
            ],
            out_specs=[
                pl.BlockSpec((pl.Squeezed(), 1, 1), lambda n, i: (n, 0, 0)),
                pl.BlockSpec((pl.Squeezed(), C, 1), lambda n, i: (n, 0, 0)),
                pl.BlockSpec((pl.Squeezed(), C, 1), lambda n, i: (n, 0, 0)),
                pl.BlockSpec((pl.Squeezed(), C, 1), lambda n, i: (n, 0, 0)),
            ],
            scratch_shapes=[
                pltpu.VMEM((1, tile), jnp.float32),   # cross-entropy acc
                pltpu.VMEM((C, tile), jnp.float32),   # dice intersection acc
                pltpu.VMEM((C, tile), jnp.float32),   # dice pred-sum acc
                pltpu.VMEM((C, 1), jnp.float32),      # dice target-count acc
            ],
        ),
        compiler_params=pltpu.CompilerParams(
            # batch axis "parallel" -> megacore split on v7x; pixel axis is the
            # reduction into the resident scratch accumulators.
            dimension_semantics=("parallel", "arbitrary"),
            vmem_limit_bytes=32 * 1024 * 1024),
        cost_estimate=cost,
    )(x3, y3, pix_col)

    # final combine: a handful of scalars / length-C vectors, done in JAX
    ce_mean = jnp.sum(ce_p) / jnp.float32(P)
    inter = jnp.sum(inter_p[:, :, 0], axis=0)
    psum = jnp.sum(psum_p[:, :, 0], axis=0)
    tsum = jnp.sum(tsum_p[:, :, 0], axis=0)
    dice = (2.0 * inter + smooth) / (psum + tsum + smooth)
    dice_loss = 1.0 - jnp.mean(dice)
    return weights[0] * ce_mean + weights[1] * dice_loss


def _reference_loss(x, y, labels, labels_to_pixels,
                    weights=(0.5, 0.5), smooth=1e-6):
    """Pure-JAX reference (F.cross_entropy + soft-dice), for sanity checking."""
    N, C, H, W = x.shape
    P = N * H * W
    logits = jnp.transpose(x, (1, 0, 2, 3)).reshape(C, P).astype(jnp.float32)
    pix_vals = jnp.asarray([labels_to_pixels[l] for l in labels], dtype=y.dtype)
    onehot = (y.reshape(1, P) == pix_vals[:, None]).astype(jnp.float32)

    log_probs = jax.nn.log_softmax(logits, axis=0)
    probs = jax.nn.softmax(logits, axis=0)
    ce = -jnp.mean(jnp.sum(onehot * log_probs, axis=0))
    inter = jnp.sum(probs * onehot, axis=1)
    dice = (2.0 * inter + smooth) / (jnp.sum(probs, axis=1)
                                     + jnp.sum(onehot, axis=1) + smooth)
    dice_loss = 1.0 - jnp.mean(dice)
    return weights[0] * ce + weights[1] * dice_loss


if __name__ == "__main__":
    labels = ["background", "liver", "kidney", "spleen"]
    labels_to_pixels = {"background": 0, "liver": 63, "kidney": 127, "spleen": 255}
    pix = jnp.asarray([labels_to_pixels[l] for l in labels], dtype=jnp.int32)

    key = jax.random.PRNGKey(0)
    k1, k2, k3, k4 = jax.random.split(key, 4)

    # case 1: exact tiling; batch=2 exercises the "parallel" (megacore) axis
    N, C, H, W = 2, 4, 16, 16
    x1 = jax.random.normal(k1, (N, C, H, W), dtype=jnp.float32)
    y1 = pix[jax.random.randint(k2, (N, H, W), 0, C)]
    loss1 = jax.block_until_ready(combined_loss(x1, y1, labels, labels_to_pixels))
    ref1 = _reference_loss(x1, y1, labels, labels_to_pixels)
    assert jnp.allclose(loss1, ref1, rtol=2e-3, atol=2e-3), (loss1, ref1)

    # case 2: multi-block pixel grid with a masked padded tail (HW=576, tile=128)
    N2, H2, W2 = 1, 24, 24
    x2 = jax.random.normal(k3, (N2, C, H2, W2), dtype=jnp.float32)
    y2 = pix[jax.random.randint(k4, (N2, H2, W2), 0, C)]
    loss2 = jax.block_until_ready(
        combined_loss(x2, y2, labels, labels_to_pixels, max_tile=128))
    ref2 = _reference_loss(x2, y2, labels, labels_to_pixels)
    assert jnp.allclose(loss2, ref2, rtol=2e-3, atol=2e-3), (loss2, ref2)

    print("KERNEL_OK")
</pallas_src>

<mosaic_0001>
module attributes {stable_mosaic.version = 11 : i64} {
  func.func @_combined_loss_kernel(%arg0: i32, %arg1: i32, %arg2: memref<1x4x256xf32, #tpu.memory_space<vmem>>, %arg3: memref<1x1x256xi32, #tpu.memory_space<vmem>>, %arg4: memref<4x1xi32, #tpu.memory_space<vmem>>, %arg5: memref<1x1x1xf32, #tpu.memory_space<vmem>>, %arg6: memref<1x4x1xf32, #tpu.memory_space<vmem>>, %arg7: memref<1x4x1xf32, #tpu.memory_space<vmem>>, %arg8: memref<1x4x1xf32, #tpu.memory_space<vmem>>, %arg9: memref<1x256xf32, #tpu.memory_space<vmem>>, %arg10: memref<4x256xf32, #tpu.memory_space<vmem>>, %arg11: memref<4x256xf32, #tpu.memory_space<vmem>>, %arg12: memref<4x1xf32, #tpu.memory_space<vmem>>) attributes {dimension_semantics = [#tpu.dimension_semantics<parallel>, #tpu.dimension_semantics<arbitrary>], iteration_bounds = array<i64: 2, 1>, scalar_prefetch = 0 : i64, scratch_operands = 4 : i64, tpu.core_type = #tpu.core_type<tc>, window_params = [{transform_indices = @transform_0, window_bounds = array<i64: 1, 4, 256>}, {transform_indices = @transform_1, window_bounds = array<i64: 1, 1, 256>}, {pipeline_mode = #tpu.pipeline_mode<synchronous>, transform_indices = @transform_2, window_bounds = array<i64: 4, 1>}, {transform_indices = @transform_3, window_bounds = array<i64: 1, 1, 1>}, {transform_indices = @transform_4, window_bounds = array<i64: 1, 4, 1>}, {transform_indices = @transform_5, window_bounds = array<i64: 1, 4, 1>}, {transform_indices = @transform_6, window_bounds = array<i64: 1, 4, 1>}]} {
    %c0_i32 = arith.constant 0 : i32
    %0 = arith.cmpi eq, %arg1, %c0_i32 : i32
    %1 = arith.extui %0 : i1 to i32
    %c0_i32_0 = arith.constant 0 : i32
    %2 = arith.cmpi ne, %1, %c0_i32_0 : i32
    scf.if %2 {
      %cst_30 = arith.constant 0.000000e+00 : f32
      %49 = vector.broadcast %cst_30 : f32 to vector<1x256xf32>
      %c0_31 = arith.constant 0 : index
      %c0_32 = arith.constant 0 : index
      %50 = vector.load %arg9[%c0_31, %c0_32] : memref<1x256xf32, #tpu.memory_space<vmem>>, vector<1x256xf32>
      tpu.vector_store %arg9[%c0_31, %c0_32], %49 {strides = array<i32>} : memref<1x256xf32, #tpu.memory_space<vmem>>, vector<1x256xf32>,
      %cst_33 = arith.constant 0.000000e+00 : f32
      %51 = vector.broadcast %cst_33 : f32 to vector<4x256xf32>
      %c0_34 = arith.constant 0 : index
      %c0_35 = arith.constant 0 : index
      %52 = vector.load %arg10[%c0_34, %c0_35] : memref<4x256xf32, #tpu.memory_space<vmem>>, vector<4x256xf32>
      tpu.vector_store %arg10[%c0_34, %c0_35], %51 {strides = array<i32>} : memref<4x256xf32, #tpu.memory_space<vmem>>, vector<4x256xf32>,
      %cst_36 = arith.constant 0.000000e+00 : f32
      %53 = vector.broadcast %cst_36 : f32 to vector<4x256xf32>
      %c0_37 = arith.constant 0 : index
      %c0_38 = arith.constant 0 : index
      %54 = vector.load %arg11[%c0_37, %c0_38] : memref<4x256xf32, #tpu.memory_space<vmem>>, vector<4x256xf32>
      tpu.vector_store %arg11[%c0_37, %c0_38], %53 {strides = array<i32>} : memref<4x256xf32, #tpu.memory_space<vmem>>, vector<4x256xf32>,
      %cst_39 = arith.constant 0.000000e+00 : f32
      %55 = vector.broadcast %cst_39 : f32 to vector<4x1xf32>
      %c0_40 = arith.constant 0 : index
      %c0_41 = arith.constant 0 : index
      %56 = vector.load %arg12[%c0_40, %c0_41] : memref<4x1xf32, #tpu.memory_space<vmem>>, vector<4x1xf32>
      tpu.vector_store %arg12[%c0_40, %c0_41], %55 {strides = array<i32>} : memref<4x1xf32, #tpu.memory_space<vmem>>, vector<4x1xf32>,
    } else {
    }
    %c0 = arith.constant 0 : index
    %c0_1 = arith.constant 0 : index
    %c0_2 = arith.constant 0 : index
    %3 = vector.load %arg2[%c0, %c0_1, %c0_2] : memref<1x4x256xf32, #tpu.memory_space<vmem>>, vector<1x4x256xf32>
    %4 = vector.shape_cast %3 : vector<1x4x256xf32> to vector<4x256xf32>
    %c0_3 = arith.constant 0 : index
    %c0_4 = arith.constant 0 : index
    %c0_5 = arith.constant 0 : index
    %5 = vector.load %arg3[%c0_3, %c0_4, %c0_5] : memref<1x1x256xi32, #tpu.memory_space<vmem>>, vector<1x1x256xi32>
    %6 = vector.shape_cast %5 : vector<1x1x256xi32> to vector<1x256xi32>
    %c0_6 = arith.constant 0 : index
    %c0_7 = arith.constant 0 : index
    %7 = vector.load %arg4[%c0_6, %c0_7] : memref<4x1xi32, #tpu.memory_space<vmem>>, vector<4x1xi32>
    %8 = vector.broadcast %6 : vector<1x256xi32> to vector<4x256xi32>
    %9 = vector.broadcast %7 : vector<4x1xi32> to vector<4x256xi32>
    %10 = arith.cmpi eq, %8, %9 : vector<4x256xi32>
    %11 = arith.extui %10 : vector<4x256xi1> to vector<4x256xi32>
    %12 = arith.sitofp %11 : vector<4x256xi32> to vector<4x256xf32>
    %cst = arith.constant dense<0xFF800000> : vector<256xf32>
    %13 = vector.multi_reduction <maximumf>, %4, %cst [0] : vector<4x256xf32> to vector<256xf32>
    %14 = vector.shape_cast %13 : vector<256xf32> to vector<1x256xf32>
    %15 = vector.broadcast %14 : vector<1x256xf32> to vector<4x256xf32>
    %16 = arith.subf %4, %15 : vector<4x256xf32>
    %17 = math.exp %16 : vector<4x256xf32>
    %cst_8 = arith.constant dense<0.000000e+00> : vector<256xf32>
    %18 = vector.multi_reduction <add>, %17, %cst_8 [0] : vector<4x256xf32> to vector<256xf32>
    %19 = vector.shape_cast %18 : vector<256xf32> to vector<1x256xf32>
    %20 = tpu.reciprocal %19 {approx = true} : vector<1x256xf32> -> vector<1x256xf32>
    %21 = vector.broadcast %20 : vector<1x256xf32> to vector<4x256xf32>
    %22 = arith.mulf %17, %21 : vector<4x256xf32>
    %23 = arith.mulf %12, %16 : vector<4x256xf32>
    %cst_9 = arith.constant dense<0.000000e+00> : vector<256xf32>
    %24 = vector.multi_reduction <add>, %23, %cst_9 [0] : vector<4x256xf32> to vector<256xf32>
    %25 = vector.shape_cast %24 : vector<256xf32> to vector<1x256xf32>
    %cst_10 = arith.constant dense<0.000000e+00> : vector<256xf32>
    %26 = vector.multi_reduction <add>, %12, %cst_10 [0] : vector<4x256xf32> to vector<256xf32>
    %27 = vector.shape_cast %26 : vector<256xf32> to vector<1x256xf32>
    %c0_11 = arith.constant 0 : index
    %c0_12 = arith.constant 0 : index
    %28 = vector.load %arg9[%c0_11, %c0_12] : memref<1x256xf32, #tpu.memory_space<vmem>>, vector<1x256xf32>
    %29 = math.log %19 : vector<1x256xf32>
    %30 = arith.mulf %27, %29 : vector<1x256xf32>
    %31 = arith.subf %30, %25 : vector<1x256xf32>
    %32 = arith.addf %28, %31 : vector<1x256xf32>
    %c0_13 = arith.constant 0 : index
    %c0_14 = arith.constant 0 : index
    %33 = vector.load %arg9[%c0_13, %c0_14] : memref<1x256xf32, #tpu.memory_space<vmem>>, vector<1x256xf32>
    tpu.vector_store %arg9[%c0_13, %c0_14], %32 {strides = array<i32>} : memref<1x256xf32, #tpu.memory_space<vmem>>, vector<1x256xf32>,
    %c0_15 = arith.constant 0 : index
    %c0_16 = arith.constant 0 : index
    %34 = vector.load %arg10[%c0_15, %c0_16] : memref<4x256xf32, #tpu.memory_space<vmem>>, vector<4x256xf32>
    %35 = arith.mulf %22, %12 : vector<4x256xf32>
    %36 = arith.addf %34, %35 : vector<4x256xf32>
    %c0_17 = arith.constant 0 : index
    %c0_18 = arith.constant 0 : index
    %37 = vector.load %arg10[%c0_17, %c0_18] : memref<4x256xf32, #tpu.memory_space<vmem>>, vector<4x256xf32>
    tpu.vector_store %arg10[%c0_17, %c0_18], %36 {strides = array<i32>} : memref<4x256xf32, #tpu.memory_space<vmem>>, vector<4x256xf32>,
    %c0_19 = arith.constant 0 : index
    %c0_20 = arith.constant 0 : index
    %38 = vector.load %arg11[%c0_19, %c0_20] : memref<4x256xf32, #tpu.memory_space<vmem>>, vector<4x256xf32>
    %39 = arith.addf %38, %22 : vector<4x256xf32>
    %c0_21 = arith.constant 0 : index
    %c0_22 = arith.constant 0 : index
    %40 = vector.load %arg11[%c0_21, %c0_22] : memref<4x256xf32, #tpu.memory_space<vmem>>, vector<4x256xf32>
    tpu.vector_store %arg11[%c0_21, %c0_22], %39 {strides = array<i32>} : memref<4x256xf32, #tpu.memory_space<vmem>>, vector<4x256xf32>,
    %c0_23 = arith.constant 0 : index
    %c0_24 = arith.constant 0 : index
    %41 = vector.load %arg12[%c0_23, %c0_24] : memref<4x1xf32, #tpu.memory_space<vmem>>, vector<4x1xf32>
    %cst_25 = arith.constant dense<0.000000e+00> : vector<4xf32>
    %42 = vector.multi_reduction <add>, %12, %cst_25 [1] : vector<4x256xf32> to vector<4xf32>
    %43 = vector.shape_cast %42 : vector<4xf32> to vector<4x1xf32>
    %44 = arith.addf %41, %43 : vector<4x1xf32>
    %c0_26 = arith.constant 0 : index
    %c0_27 = arith.constant 0 : index
    %45 = vector.load %arg12[%c0_26, %c0_27] : memref<4x1xf32, #tpu.memory_space<vmem>>, vector<4x1xf32>
    tpu.vector_store %arg12[%c0_26, %c0_27], %44 {strides = array<i32>} : memref<4x1xf32, #tpu.memory_space<vmem>>, vector<4x1xf32>,
    %c0_i32_28 = arith.constant 0 : i32
    %46 = arith.cmpi eq, %arg1, %c0_i32_28 : i32
    %47 = arith.extui %46 : i1 to i32
    %c0_i32_29 = arith.constant 0 : i32
    %48 = arith.cmpi ne, %47, %c0_i32_29 : i32
    scf.if %48 {
      %c0_30 = arith.constant 0 : index
      %c0_31 = arith.constant 0 : index
      %49 = vector.load %arg9[%c0_30, %c0_31] : memref<1x256xf32, #tpu.memory_space<vmem>>, vector<1x256xf32>
      %cst_32 = arith.constant dense<0.000000e+00> : vector<1xf32>
      %50 = vector.multi_reduction <add>, %49, %cst_32 [1] : vector<1x256xf32> to vector<1xf32>
      %51 = vector.shape_cast %50 : vector<1xf32> to vector<1x1xf32>
      %c0_33 = arith.constant 0 : index
      %c0_34 = arith.constant 0 : index
      %c0_35 = arith.constant 0 : index
      %52 = vector.load %arg5[%c0_33, %c0_34, %c0_35] : memref<1x1x1xf32, #tpu.memory_space<vmem>>, vector<1x1x1xf32>
      %53 = vector.shape_cast %52 : vector<1x1x1xf32> to vector<1x1xf32>
      %54 = vector.shape_cast %51 : vector<1x1xf32> to vector<1x1x1xf32>
      tpu.vector_store %arg5[%c0_33, %c0_34, %c0_35], %54 {strides = array<i32>} : memref<1x1x1xf32, #tpu.memory_space<vmem>>, vector<1x1x1xf32>,
      %c0_36 = arith.constant 0 : index
      %c0_37 = arith.constant 0 : index
      %55 = vector.load %arg10[%c0_36, %c0_37] : memref<4x256xf32, #tpu.memory_space<vmem>>, vector<4x256xf32>
      %cst_38 = arith.constant dense<0.000000e+00> : vector<4xf32>
      %56 = vector.multi_reduction <add>, %55, %cst_38 [1] : vector<4x256xf32> to vector<4xf32>
      %57 = vector.shape_cast %56 : vector<4xf32> to vector<4x1xf32>
      %c0_39 = arith.constant 0 : index
      %c0_40 = arith.constant 0 : index
      %c0_41 = arith.constant 0 : index
      %58 = vector.load %arg6[%c0_39, %c0_40, %c0_41] : memref<1x4x1xf32, #tpu.memory_space<vmem>>, vector<1x4x1xf32>
      %59 = vector.shape_cast %58 : vector<1x4x1xf32> to vector<4x1xf32>
      %60 = vector.shape_cast %57 : vector<4x1xf32> to vector<1x4x1xf32>
      tpu.vector_store %arg6[%c0_39, %c0_40, %c0_41], %60 {strides = array<i32>} : memref<1x4x1xf32, #tpu.memory_space<vmem>>, vector<1x4x1xf32>,
      %c0_42 = arith.constant 0 : index
      %c0_43 = arith.constant 0 : index
      %61 = vector.load %arg11[%c0_42, %c0_43] : memref<4x256xf32, #tpu.memory_space<vmem>>, vector<4x256xf32>
      %cst_44 = arith.constant dense<0.000000e+00> : vector<4xf32>
      %62 = vector.multi_reduction <add>, %61, %cst_44 [1] : vector<4x256xf32> to vector<4xf32>
      %63 = vector.shape_cast %62 : vector<4xf32> to vector<4x1xf32>
      %c0_45 = arith.constant 0 : index
      %c0_46 = arith.constant 0 : index
      %c0_47 = arith.constant 0 : index
      %64 = vector.load %arg7[%c0_45, %c0_46, %c0_47] : memref<1x4x1xf32, #tpu.memory_space<vmem>>, vector<1x4x1xf32>
      %65 = vector.shape_cast %64 : vector<1x4x1xf32> to vector<4x1xf32>
      %66 = vector.shape_cast %63 : vector<4x1xf32> to vector<1x4x1xf32>
      tpu.vector_store %arg7[%c0_45, %c0_46, %c0_47], %66 {strides = array<i32>} : memref<1x4x1xf32, #tpu.memory_space<vmem>>, vector<1x4x1xf32>,
      %c0_48 = arith.constant 0 : index
      %c0_49 = arith.constant 0 : index
      %67 = vector.load %arg12[%c0_48, %c0_49] : memref<4x1xf32, #tpu.memory_space<vmem>>, vector<4x1xf32>
      %c0_50 = arith.constant 0 : index
      %c0_51 = arith.constant 0 : index
      %c0_52 = arith.constant 0 : index
      %68 = vector.load %arg8[%c0_50, %c0_51, %c0_52] : memref<1x4x1xf32, #tpu.memory_space<vmem>>, vector<1x4x1xf32>
      %69 = vector.shape_cast %68 : vector<1x4x1xf32> to vector<4x1xf32>
      %70 = vector.shape_cast %67 : vector<4x1xf32> to vector<1x4x1xf32>
      tpu.vector_store %arg8[%c0_50, %c0_51, %c0_52], %70 {strides = array<i32>} : memref<1x4x1xf32, #tpu.memory_space<vmem>>, vector<1x4x1xf32>,
    } else {
    }
    return
  }
  func.func @transform_0(%arg0: i32, %arg1: i32) -> (i32, i32, i32) {
    %c0_i32 = arith.constant 0 : i32
    %c0_i32_0 = arith.constant 0 : i32
    return %arg0, %c0_i32, %arg1 : i32, i32, i32
  }
  func.func @transform_1(%arg0: i32, %arg1: i32) -> (i32, i32, i32) {
    %c0_i32 = arith.constant 0 : i32
    %c0_i32_0 = arith.constant 0 : i32
    return %arg0, %c0_i32, %arg1 : i32, i32, i32
  }
  func.func @transform_2(%arg0: i32, %arg1: i32) -> (i32, i32) {
    %c0_i32 = arith.constant 0 : i32
    %c0_i32_0 = arith.constant 0 : i32
    %c0_i32_1 = arith.constant 0 : i32
    return %c0_i32, %c0_i32_0 : i32, i32
  }
  func.func @transform_3(%arg0: i32, %arg1: i32) -> (i32, i32, i32) {
    %c0_i32 = arith.constant 0 : i32
    %c0_i32_0 = arith.constant 0 : i32
    %c0_i32_1 = arith.constant 0 : i32
    return %arg0, %c0_i32, %c0_i32_0 : i32, i32, i32
  }
  func.func @transform_4(%arg0: i32, %arg1: i32) -> (i32, i32, i32) {
    %c0_i32 = arith.constant 0 : i32
    %c0_i32_0 = arith.constant 0 : i32
    %c0_i32_1 = arith.constant 0 : i32
    return %arg0, %c0_i32, %c0_i32_0 : i32, i32, i32
  }
  func.func @transform_5(%arg0: i32, %arg1: i32) -> (i32, i32, i32) {
    %c0_i32 = arith.constant 0 : i32
    %c0_i32_0 = arith.constant 0 : i32
    %c0_i32_1 = arith.constant 0 : i32
    return %arg0, %c0_i32, %c0_i32_0 : i32, i32, i32
  }
  func.func @transform_6(%arg0: i32, %arg1: i32) -> (i32, i32, i32) {
    %c0_i32 = arith.constant 0 : i32
    %c0_i32_0 = arith.constant 0 : i32
    %c0_i32_1 = arith.constant 0 : i32
    return %arg0, %c0_i32, %c0_i32_0 : i32, i32, i32
  }
}

</mosaic_0001>

<llo_original>
// kernel: tpu_custom_call.1
$region0: #{tpu_custom_call.1}
  #allocation0 [shape = 'u32[]', space=smem, size = 0x4, offset = 0x4, fixed_abs, tag = 'smem constant byte address 0x4 - core index']
  #allocation1 [shape = 'u32[144,128]{1,0:T(1,128)}', space=vmem, size = 0x12000, scoped, tag = 'internal scratch']
  #allocation2 [shape = 'f32[1,256]{1,0:T(1,128)}', space=vmem, size = 0x400, scoped, tag = 'scratch operand']
  #allocation3 [shape = 'f32[4,256]{1,0:T(4,128)}', space=vmem, size = 0x1000, scoped, tag = 'scratch operand']
  #allocation4 [shape = 'f32[4,256]{1,0:T(4,128)}', space=vmem, size = 0x1000, scoped, tag = 'scratch operand']
  #allocation5 [shape = 'f32[4,1]{1,0:T(4,128)}', space=vmem, size = 0x800, scoped, tag = 'scratch operand']
  %s0 = inlined_call_operand.hbm [shape: f32[2,4,256], index: 0, kind: input, shape index: {}]
  %s1 = inlined_call_operand.vmem [shape: s32[2,1,256], index: 1, kind: input, shape index: {}]
  %s2 = inlined_call_operand.vmem [shape: s32[4,1], index: 2, kind: input, shape index: {}]
  %s3 = inlined_call_operand.vmem [shape: f32[2,1,1], index: 3, kind: output, shape index: {0}]
  %s4 = inlined_call_operand.vmem [shape: f32[2,4,1], index: 4, kind: output, shape index: {1}]
  %s5 = inlined_call_operand.vmem [shape: f32[2,4,1], index: 5, kind: output, shape index: {2}]
  %s6 = inlined_call_operand.vmem [shape: f32[2,4,1], index: 6, kind: output, shape index: {3}]
  %7 = xla_tuple %s3, %s4, %s5, %s6
  %s8 = sld [smem:[#allocation0]]
  $region81: #{tpu_custom_call.1} parent=0
    _
  %s10 = ssub.s32 1, %s8
  %s11 = scalar_select 0, %s10, %s8
  $region1: #{tpu_custom_call.1} parent=0
    #allocation6 [shape = 'u8[8192]{0}', space=vmem, size = 0x2000, scoped, tag = 'input window, operand 0']
    #allocation7 [shape = 's32[2]{0}', space=sflag, size = 0x8, scoped, tag = 'scoped memory for tpu_custom_call.1']
    %12 = vsyncpa [#allocation7], 0
    %s13 = scalar_lea.sflag [#allocation7], 1
    %14 = vsyncpa %s13, 0
    loop: start=0, step=1, limit=4
    $region2: #{tpu_custom_call.1} parent=1 // loop_pre_header
      _
    $region3: #{tpu_custom_call.1} parent=1 // loop_header
      %s16 = sphi 0, %s20
      %p17 = scmp.ge.s32.totalorder %s16, 4
      %s23 = sphi 0, %s35
      %s24 = sphi 0, %s31
      %s25 = sphi 0, %s23
      %s26 = sphi 0, %s24
      %s27 = sphi 0, %s25
      %s28 = sphi 0, %s26
      %s40 = sphi 0, %s42
      %s43 = sphi 0, %s40
      %s44 = sphi 0, %s43
      %s60 = sphi 0, %s44
      %s68 = sphi 0, %s70
      %s71 = sphi 0, %s68
      %s72 = sphi 0, %s71
      %s88 = sphi 0, %s72
      %s92 = sphi 0, %s92
      %s94 = sphi 0, %s92
      %s95 = sphi 0, %s94
      %s109 = sphi 0, %s95
      %s115 = sphi 0, %s117
      %s118 = sphi 0, %s115
      %s119 = sphi 0, %s118
      %s135 = sphi 0, %s119
      %s141 = sphi 0, %s143
      %s144 = sphi 0, %s141
      %s145 = sphi 0, %s144
      %s161 = sphi 0, %s145
      %s167 = sphi 0, %s169
      %s170 = sphi 0, %s167
      %s171 = sphi 0, %s170
      %s187 = sphi 0, %s171
      %s193 = sphi 0, %s195
      %s196 = sphi 0, %s193
      %s197 = sphi 0, %s196
      %s213 = sphi 0, %s197
    $region4: #{tpu_custom_call.1} parent=1 // loop_header_branch
      %19 = sbr.rel (%p17) target = $region8
    $region5: #{tpu_custom_call.1} parent=1 // loop_body
      %s21 = ssub.s32 %s16, 1
      %s22 = ssub.s32 %s16, 2
      %s29 = sadd.s32 1, %s24
      %p30 = scmp.ge.s32.totalorder %s29, 1
      %s31 = scalar_select %p30, 0, %s29
      %s32 = sadd.s32 1, %s23
      %s33 = scalar_select %p30, %s32, %s23
      %p34 = scmp.ge.s32.totalorder %s33, 2
      %s35 = scalar_select %p34, 0, %s33
      %s36 = ssub.s32 %s23, %s35
      %s37 = ssub.s32 %s24, %s31
      %s38 = sor.u32 %s36, %s37
      %p39 = scmp.eq.s32.totalorder %s38, 0
      %s41 = sadd.s32 %s40, 1
      %s42 = scalar_select %p39, %s40, %s41
      %p45 = pneg %p39
      %p46 = scmp.eq.s32.totalorder %s16, 1
      %p47 = por %p45, %p46
      %p48 = scmp.ne.s32.totalorder %s40, %s43
      %p49 = scmp.eq.s32.totalorder %s16, 0
      %p50 = por %p48, %p49
      %p51 = scmp.ne.s32.totalorder %s40, %s43
      %p52 = scmp.eq.s32.totalorder %s21, 1
      %p53 = por %p51, %p52
      %p54 = scmp.ne.s32.totalorder %s43, %s44
      %p55 = scmp.eq.s32.totalorder %s21, 0
      %p56 = por %p54, %p55
      %p57 = scmp.ne.s32.totalorder %s43, %s44
      %p58 = scmp.eq.s32.totalorder %s22, 1
      %p59 = por %p57, %p58
      %p61 = scmp.ne.s32.totalorder %s44, %s60
      %p62 = scmp.eq.s32.totalorder %s22, 0
      %p63 = por %p61, %p62
      %s64 = ssub.s32 %s23, %s35
      %s65 = ssub.s32 %s24, %s31
      %s66 = sor.u32 %s64, %s65
      %p67 = scmp.eq.s32.totalorder %s66, 0
      %s69 = sadd.s32 %s68, 1
      %s70 = scalar_select %p67, %s68, %s69
      %p73 = pneg %p67
      %p74 = scmp.eq.s32.totalorder %s16, 1
      %p75 = por %p73, %p74
      %p76 = scmp.ne.s32.totalorder %s68, %s71
      %p77 = scmp.eq.s32.totalorder %s16, 0
      %p78 = por %p76, %p77
      %p79 = scmp.ne.s32.totalorder %s68, %s71
      %p80 = scmp.eq.s32.totalorder %s21, 1
      %p81 = por %p79, %p80
      %p82 = scmp.ne.s32.totalorder %s71, %s72
      %p83 = scmp.eq.s32.totalorder %s21, 0
      %p84 = por %p82, %p83
      %p85 = scmp.ne.s32.totalorder %s71, %s72
      %p86 = scmp.eq.s32.totalorder %s22, 1
      %p87 = por %p85, %p86
      %p89 = scmp.ne.s32.totalorder %s72, %s88
      %p90 = scmp.eq.s32.totalorder %s22, 0
      %p91 = por %p89, %p90
      %s93 = sadd.s32 %s92, 1
      %p96 = scmp.eq.s32.totalorder %s16, 1
      %p97 = scmp.ne.s32.totalorder %s92, %s94
      %p98 = scmp.eq.s32.totalorder %s16, 0
      %p99 = por %p97, %p98
      %p100 = scmp.ne.s32.totalorder %s92, %s94
      %p101 = scmp.eq.s32.totalorder %s21, 1
      %p102 = por %p100, %p101
      %p103 = scmp.ne.s32.totalorder %s94, %s95
      %p104 = scmp.eq.s32.totalorder %s21, 0
      %p105 = por %p103, %p104
      %p106 = scmp.ne.s32.totalorder %s94, %s95
      %p107 = scmp.eq.s32.totalorder %s22, 1
      %p108 = por %p106, %p107
      %p110 = scmp.ne.s32.totalorder %s95, %s109
      %p111 = scmp.eq.s32.totalorder %s22, 0
      %p112 = por %p110, %p111
      %s113 = ssub.s32 %s23, %s35
      %p114 = scmp.eq.s32.totalorder %s113, 0
      %s116 = sadd.s32 %s115, 1
      %s117 = scalar_select %p114, %s115, %s116
      %p120 = pneg %p114
      %p121 = scmp.eq.s32.totalorder %s16, 1
      %p122 = por %p120, %p121
      %p123 = scmp.ne.s32.totalorder %s115, %s118
      %p124 = scmp.eq.s32.totalorder %s16, 0
      %p125 = por %p123, %p124
      %p126 = scmp.ne.s32.totalorder %s115, %s118
      %p127 = scmp.eq.s32.totalorder %s21, 1
      %p128 = por %p126, %p127
      %p129 = scmp.ne.s32.totalorder %s118, %s119
      %p130 = scmp.eq.s32.totalorder %s21, 0
      %p131 = por %p129, %p130
      %p132 = scmp.ne.s32.totalorder %s118, %s119
      %p133 = scmp.eq.s32.totalorder %s22, 1
      %p134 = por %p132, %p133
      %p136 = scmp.ne.s32.totalorder %s119, %s135
      %p137 = scmp.eq.s32.totalorder %s22, 0
      %p138 = por %p136, %p137
      %s139 = ssub.s32 %s23, %s35
      %p140 = scmp.eq.s32.totalorder %s139, 0
      %s142 = sadd.s32 %s141, 1
      %s143 = scalar_select %p140, %s141, %s142
      %p146 = pneg %p140
      %p147 = scmp.eq.s32.totalorder %s16, 1
      %p148 = por %p146, %p147
      %p149 = scmp.ne.s32.totalorder %s141, %s144
      %p150 = scmp.eq.s32.totalorder %s16, 0
      %p151 = por %p149, %p150
      %p152 = scmp.ne.s32.totalorder %s141, %s144
      %p153 = scmp.eq.s32.totalorder %s21, 1
      %p154 = por %p152, %p153
      %p155 = scmp.ne.s32.totalorder %s144, %s145
      %p156 = scmp.eq.s32.totalorder %s21, 0
      %p157 = por %p155, %p156
      %p158 = scmp.ne.s32.totalorder %s144, %s145
      %p159 = scmp.eq.s32.totalorder %s22, 1
      %p160 = por %p158, %p159
      %p162 = scmp.ne.s32.totalorder %s145, %s161
      %p163 = scmp.eq.s32.totalorder %s22, 0
      %p164 = por %p162, %p163
      %s165 = ssub.s32 %s23, %s35
      %p166 = scmp.eq.s32.totalorder %s165, 0
      %s168 = sadd.s32 %s167, 1
      %s169 = scalar_select %p166, %s167, %s168
      %p172 = pneg %p166
      %p173 = scmp.eq.s32.totalorder %s16, 1
      %p174 = por %p172, %p173
      %p175 = scmp.ne.s32.totalorder %s167, %s170
      %p176 = scmp.eq.s32.totalorder %s16, 0
      %p177 = por %p175, %p176
      %p178 = scmp.ne.s32.totalorder %s167, %s170
      %p179 = scmp.eq.s32.totalorder %s21, 1
      %p180 = por %p178, %p179
      %p181 = scmp.ne.s32.totalorder %s170, %s171
      %p182 = scmp.eq.s32.totalorder %s21, 0
      %p183 = por %p181, %p182
      %p184 = scmp.ne.s32.totalorder %s170, %s171
      %p185 = scmp.eq.s32.totalorder %s22, 1
      %p186 = por %p184, %p185
      %p188 = scmp.ne.s32.totalorder %s171, %s187
      %p189 = scmp.eq.s32.totalorder %s22, 0
      %p190 = por %p188, %p189
      %s191 = ssub.s32 %s23, %s35
      %p192 = scmp.eq.s32.totalorder %s191, 0
      %s194 = sadd.s32 %s193, 1
      %s195 = scalar_select %p192, %s193, %s194
      %p198 = pneg %p192
      %p199 = scmp.eq.s32.totalorder %s16, 1
      %p200 = por %p198, %p199
      %p201 = scmp.ne.s32.totalorder %s193, %s196
      %p202 = scmp.eq.s32.totalorder %s16, 0
      %p203 = por %p201, %p202
      %p204 = scmp.ne.s32.totalorder %s193, %s196
      %p205 = scmp.eq.s32.totalorder %s21, 1
      %p206 = por %p204, %p205
      %p207 = scmp.ne.s32.totalorder %s196, %s197
      %p208 = scmp.eq.s32.totalorder %s21, 0
      %p209 = por %p207, %p208
      %p210 = scmp.ne.s32.totalorder %s196, %s197
      %p211 = scmp.eq.s32.totalorder %s22, 1
      %p212 = por %p210, %p211
      %p214 = scmp.ne.s32.totalorder %s197, %s213
      %p215 = scmp.eq.s32.totalorder %s22, 0
      %p216 = por %p214, %p215
      %p217 = scmp.le.s32.totalorder 1, %s16
      %p218 = scmp.lt.s32.totalorder %s16, 3
      %p219 = pnand %p217, %p218
      %p220 = pneg %p219
      // Predicated region
      $region9: #{tpu_custom_call.1} parent=5 // pred_check
        _
      $region10: #{tpu_custom_call.1} parent=5 // pred_check_branch
        %222 = sbr.rel (%p219) target = $region12
      $region11: #{tpu_custom_call.1} parent=5 // pred_region
        %s223 = ssub.s32 %s16, 1
        // Predicated region
        $region13: #{tpu_custom_call.1} parent=11 // pred_check
          %p224 = pneg %p105
        $region14: #{tpu_custom_call.1} parent=11 // pred_check_branch
          %226 = sbr.rel (%p224) target = $region16
        $region15: #{tpu_custom_call.1} parent=11 // pred_region
          _
        $region16: #{tpu_custom_call.1} parent=11 // pred_fallthru
          _
      $region12: #{tpu_custom_call.1} parent=5 // pred_fallthru
        _
      %p227 = scmp.lt.s32.totalorder %s16, 2
      // Predicated region
      $region17: #{tpu_custom_call.1} parent=5 // pred_check
        %p228 = pneg %p227
      $region18: #{tpu_custom_call.1} parent=5 // pred_check_branch
        %230 = sbr.rel (%p228) target = $region20
      $region19: #{tpu_custom_call.1} parent=5 // pred_region
        // Predicated region
        $region21: #{tpu_custom_call.1} parent=19 // pred_check
          %p231 = pneg %p50
        $region22: #{tpu_custom_call.1} parent=19 // pred_check_branch
          %233 = sbr.rel (%p231) target = $region24
        $region23: #{tpu_custom_call.1} parent=19 // pred_region
          %s234 = sand.u32 %s40, 1
          %s235 = scalar_lea.sflag [#allocation7], %s234
          %s236 = sand.u32 %s40, 1
          %s237 = smul.addr %s236, 8
          %s238 = scalar_lea.vmem [#allocation6], %s237
          %s239 = smul.u32 2, %s24
          %s241 = ssub.s32 128, 128
          %242 = vsyncadd %s235, %s241
          %s243 = smul.addr %s23, 2
          %s244 = sadd.s32 %s239, %s243
          %s245 = smul.addr %s244, 64
          %s246 = scalar_lea.hbm %s0, %s245
          %s248 = sshll.u32 %s238, 4
          %s249 = int_to_ptr.vmem [resolvable:$true] %s248
          %251 = dma.hbm_to_vmem [thread:$0]  %s246, 128, %s249, %s235
        $region24: #{tpu_custom_call.1} parent=19 // pred_fallthru
          _
        // Predicated region
        $region25: #{tpu_custom_call.1} parent=19 // pred_check
          %p252 = pneg %p78
        $region26: #{tpu_custom_call.1} parent=19 // pred_check_branch
          %254 = sbr.rel (%p252) target = $region28
        $region27: #{tpu_custom_call.1} parent=19 // pred_region
          %s255 = smul.u32 2, %s24
          %p256 = scmp.lt.s32.totalorder %s23, 1
          %s257 = scalar_select %p256, %s23, 1
          %p258 = scmp.lt.s32.totalorder %s255, 1
          %s259 = scalar_select %p258, %s255, 1
          %s260 = smul.addr %s257, 2
          %s261 = sadd.s32 %s259, %s260
          %s262 = scalar_lea.vmem %s1, %s261
          %s263 = smul.u32 2, %s24
        $region28: #{tpu_custom_call.1} parent=19 // pred_fallthru
          _
      $region20: #{tpu_custom_call.1} parent=5 // pred_fallthru
        _
      %p264 = scmp.le.s32.totalorder 1, %s16
      %p265 = scmp.lt.s32.totalorder %s16, 3
      %p266 = pnand %p264, %p265
      %p267 = pneg %p266
      // Predicated region
      $region29: #{tpu_custom_call.1} parent=5 // pred_check
        _
      $region30: #{tpu_custom_call.1} parent=5 // pred_check_branch
        %269 = sbr.rel (%p266) target = $region32
      $region31: #{tpu_custom_call.1} parent=5 // pred_region
        %s270 = ssub.s32 %s16, 1
        %s271 = sand.u32 %s43, 1
        %s272 = scalar_lea.sflag [#allocation7], %s271
        %s273 = sand.u32 %s43, 1
        %s274 = smul.addr %s273, 8
        %s275 = scalar_lea.vmem [#allocation6], %s274
        // Predicated region
        $region33: #{tpu_custom_call.1} parent=31 // pred_check
          %p276 = pneg %p56
        $region34: #{tpu_custom_call.1} parent=31 // pred_check_branch
          %278 = sbr.rel (%p276) target = $region36
        $region35: #{tpu_custom_call.1} parent=31 // pred_region
          %279 = dma.done %s272, 128
        $region36: #{tpu_custom_call.1} parent=31 // pred_fallthru
          _
        %s280 = sand.u32 %s43, 1
        %s281 = scalar_lea.sflag [#allocation7], %s280
        %s282 = sand.u32 %s43, 1
        %s283 = smul.addr %s282, 8
        %s284 = scalar_lea.vmem [#allocation6], %s283
        %p285 = pneg %p56
        %p286 = pneg %p53
        %s287 = smul.u32 2, %s26
        %p288 = scmp.lt.s32.totalorder %s25, 1
        %s289 = scalar_select %p288, %s25, 1
        %p290 = scmp.lt.s32.totalorder %s287, 1
        %s291 = scalar_select %p290, %s287, 1
        %s292 = smul.addr %s289, 2
        %s293 = sadd.s32 %s291, %s292
        %s294 = scalar_lea.vmem %s1, %s293
        %p295 = pneg %p84
        %p296 = pneg %p81
        %p297 = pneg %p105
        %p298 = pneg %p102
        %p299 = pneg %p131
        %p300 = pneg %p128
        %p301 = scmp.lt.s32.totalorder %s25, 1
        %s302 = scalar_select %p301, %s25, 1
        %s303 = scalar_lea.vmem %s3, %s302
        %p304 = pneg %p157
        %p305 = pneg %p154
        %p306 = scmp.lt.s32.totalorder %s25, 1
        %s307 = scalar_select %p306, %s25, 1
        %s308 = smul.addr %s307, 4
        %s309 = scalar_lea.vmem %s4, %s308
        %p310 = pneg %p183
        %p311 = pneg %p180
        %p312 = scmp.lt.s32.totalorder %s25, 1
        %s313 = scalar_select %p312, %s25, 1
        %s314 = smul.addr %s313, 4
        %s315 = scalar_lea.vmem %s5, %s314
        %p316 = pneg %p209
        %p317 = pneg %p206
        %p318 = scmp.lt.s32.totalorder %s25, 1
        %s319 = scalar_select %p318, %s25, 1
        %s320 = smul.addr %s319, 4
        %s321 = scalar_lea.vmem %s6, %s320
        %s322 = smul.u32 2, %s26
        %s323 = smul.u32 2, %s26
        %p324 = scmp.lt.s32.totalorder %s25, 1
        %s325 = scalar_select %p324, %s25, 1
        %p326 = scmp.lt.s32.totalorder %s323, 1
        %s327 = scalar_select %p326, %s323, 1
        %s328 = smul.addr %s325, 2
        %s329 = sadd.s32 %s327, %s328
        %s330 = scalar_lea.vmem %s1, %s329
        %s331 = smul.u32 2, %s26
        %p332 = scmp.lt.s32.totalorder %s25, 1
        %s333 = scalar_select %p332, %s25, 1
        %s334 = scalar_lea.vmem %s3, %s333
        %p335 = scmp.lt.s32.totalorder %s25, 1
        %s336 = scalar_select %p335, %s25, 1
        %s337 = smul.addr %s336, 4
        %s338 = scalar_lea.vmem %s4, %s337
        %p339 = scmp.lt.s32.totalorder %s25, 1
        %s340 = scalar_select %p339, %s25, 1
        %s341 = smul.addr %s340, 4
        %s342 = scalar_lea.vmem %s5, %s341
        %p343 = scmp.lt.s32.totalorder %s25, 1
        %s344 = scalar_select %p343, %s25, 1
        %s345 = smul.addr %s344, 4
        %s346 = scalar_lea.vmem %s6, %s345
        %p347 = scmp.eq.s32.totalorder %s26, 0
        // Predicated region
        $region37: #{tpu_custom_call.1} parent=31 // pred_check
          %p348 = pneg %p347
        $region38: #{tpu_custom_call.1} parent=31 // pred_check_branch
          %350 = sbr.rel (%p348) target = $region40
        $region39: #{tpu_custom_call.1} parent=31 // pred_region
          %v351 = vlaneseq
          %vm352 = vcmp.ge.s32.totalorder %v351, 0
          %vm353 = vcmp.lt.s32.totalorder %v351, 256
          %vm354 = vmand %vm352, %vm353
          %355 = vst.msk [vmem:[#allocation2] sm:$0x3] %vm354, 0.0
          %356 = vst [vmem:[#allocation3] sm:$0xff] 0.0
          %357 = vst [vmem:[#allocation4] sm:$0xff] 0.0
          %vm358 = vcmask 3072
          %359 = vst.msk [vmem:[#allocation5] sm:$0xf] %vm358, 0.0
        $region40: #{tpu_custom_call.1} parent=31 // pred_fallthru
          _
        %v360 = vld [vmem:[%s275] sm:$0xff]
        %v361 = vld [vmem:[%s330] sm:$0x3]
        %v362 = vld [vmem:[%s2] sm:$0xf]
        %v363 = vlaneseq
        %v364 = vshrl.u32 %v363, 7
        %v365 = vsub.s32 0, %v364
        %v366 = vrot.slane %v361, %v365
        %v367 = vlaneseq
        %v368 = vshrl.u32 %v367, 7
        %v369 = vsub.s32 1, %v368
        %v370 = vrot.slane %v361, %v369
        %371 = vset.pattern.permute.xlu0 0
        %372 = vperm.xlu0 %371, %v362
        %v373 = vpop.permute.xlu0 %372
        %vm374 = vcmp.eq.s32.totalorder %v366, %v373
        %vm375 = vcmp.eq.s32.totalorder %v370, %v373
        %v376 = vsel %vm374, 1, 0
        %v377 = vsel %vm375, 1, 0
        %v378 = vcvt.s32.f32 %v376
        %v379 = vcvt.s32.f32 %v377
        %v381 = vcombine.high %v360, %v360
        %vm383 = vcmask 1043456
        %v384 = vsel %vm383, %v360, -inf
        %v385 = vrot.slane %v384, 4
        %v386 = vmax.f32 %v384, %v385
        %v387 = vrot.slane %v386, 2
        %v388 = vmax.f32 %v386, %v387
        %v389 = vrot.slane %v388, 1
        %v390 = vmax.f32 %v388, %v389
        %v391 = vsel %vm383, %v381, -inf
        %v392 = vrot.slane %v391, 4
        %v393 = vmax.f32 %v391, %v392
        %v394 = vrot.slane %v393, 2
        %v395 = vmax.f32 %v393, %v394
        %v396 = vrot.slane %v395, 1
        %v397 = vmax.f32 %v395, %v396
        %v400 = vcombine.low %v390, %v397
        %v402 = vsub.f32 %v360, %v400
        %v403 = vmul.f32 %v402, 1.442695
        %v404 = vpow.pop %v403
        %v406 = vcombine.high %v404, %v404
        %v408 = vsel %vm383, %v404, 0.0
        %v409 = vrot.slane %v408, 4
        %v410 = vadd.f32 %v408, %v409
        %v411 = vrot.slane %v410, 2
        %v412 = vadd.f32 %v410, %v411
        %v413 = vrot.slane %v412, 1
        %v414 = vadd.f32 %v412, %v413
        %v415 = vsel %vm383, %v406, 0.0
        %v416 = vrot.slane %v415, 4
        %v417 = vadd.f32 %v415, %v416
        %v418 = vrot.slane %v417, 2
        %v419 = vadd.f32 %v417, %v418
        %v420 = vrot.slane %v419, 1
        %v421 = vadd.f32 %v419, %v420
        %v422 = vrcp.pop %v414
        %v423 = vrcp.pop %v421
        %v426 = vcombine.low %v422, %v423
        %v428 = vmul.f32 %v404, %v426
        %v430 = vcombine.high %v402, %v402
        %v432 = vmul.f32 %v378, %v402
        %v433 = vmul.f32 %v379, %v430
        %v434 = vsel %vm383, %v432, 0.0
        %v435 = vrot.slane %v434, 4
        %v436 = vadd.f32 %v434, %v435
        %v437 = vrot.slane %v436, 2
        %v438 = vadd.f32 %v436, %v437
        %v439 = vrot.slane %v438, 1
        %v440 = vadd.f32 %v438, %v439
        %v441 = vsel %vm383, %v433, 0.0
        %v442 = vrot.slane %v441, 4
        %v443 = vadd.f32 %v441, %v442
        %v444 = vrot.slane %v443, 2
        %v445 = vadd.f32 %v443, %v444
        %v446 = vrot.slane %v445, 1
        %v447 = vadd.f32 %v445, %v446
        %v448 = vsel %vm383, %v378, 0.0
        %v449 = vrot.slane %v448, 4
        %v450 = vadd.f32 %v448, %v449
        %v451 = vrot.slane %v450, 2
        %v452 = vadd.f32 %v450, %v451
        %v453 = vrot.slane %v452, 1
        %v454 = vadd.f32 %v452, %v453
        %v455 = vsel %vm383, %v379, 0.0
        %v456 = vrot.slane %v455, 4
        %v457 = vadd.f32 %v455, %v456
        %v458 = vrot.slane %v457, 2
        %v459 = vadd.f32 %v457, %v458
        %v460 = vrot.slane %v459, 1
        %v461 = vadd.f32 %v459, %v460
        %v462 = vld [vmem:[#allocation2] sm:$0x3]
        %v463 = vlog2.pop %v414
        %v464 = vmul.f32 %v463, 0.6931472
        %v465 = vlog2.pop %v421
        %v466 = vmul.f32 %v465, 0.6931472
        %v467 = vmul.f32 %v454, %v464
        %v468 = vmul.f32 %v461, %v466
        %v469 = vsub.f32 %v467, %v440
        %v470 = vsub.f32 %v468, %v447
        %v473 = vcombine.low %v469, %v470
        %v475 = vunpack.c.l.s4 1966171168
        %v476 = vunpack.c.0.s8 %v475
        %v477 = vlaneseq
        %v478 = vshrl.u32 %v477, 7
        %v479 = vsub.s32 %v476, %v478
        %v480 = vrot.slane %v473, %v479
        %v482 = vunpack.c.l.s4 1966171168
        %v483 = vunpack.c.0.s8 %v482
        %v484 = vlaneseq
        %v485 = vshrl.u32 %v484, 7
        %v486 = vsub.s32 %v483, %v485
        %v487 = vrot.slane %v480, %v486
        %v489 = vadd.f32 %v462, %v487
        %v490 = vlaneseq
        %vm491 = vcmp.ge.s32.totalorder %v490, 0
        %vm492 = vcmp.lt.s32.totalorder %v490, 256
        %vm493 = vmand %vm491, %vm492
        %494 = vst.msk [vmem:[#allocation2] sm:$0x3] %vm493, %v489
        %v495 = vld [vmem:[#allocation3] sm:$0xff]
        %v498 = vcombine.low %v378, %v379
        %v500 = vmul.f32 %v428, %v498
        %v501 = vadd.f32 %v495, %v500
        %502 = vst [vmem:[#allocation3] sm:$0xff] %v501
        %v503 = vld [vmem:[#allocation4] sm:$0xff]
        %v504 = vadd.f32 %v503, %v428
        %505 = vst [vmem:[#allocation4] sm:$0xff] %v504
        %v506 = vld [vmem:[#allocation5] sm:$0xf]
        %v507 = vadd.f32 %v448, %v455
        %508 = vadd.xlane.f32.xlu0 %v507
        %v509 = vpop.xlane.xlu0 %508
        %v510 = vadd.f32 %v506, %v509
        %vm511 = vcmask 3072
        %512 = vst.msk [vmem:[#allocation5] sm:$0xf] %vm511, %v510
        // Predicated region
        $region41: #{tpu_custom_call.1} parent=31 // pred_check
          %p513 = pneg %p347
        $region42: #{tpu_custom_call.1} parent=31 // pred_check_branch
          %515 = sbr.rel (%p513) target = $region44
        $region43: #{tpu_custom_call.1} parent=31 // pred_region
          %v516 = vld [vmem:[#allocation2] sm:$0x3]
          %v518 = vlaneseq
          %v519 = vshrl.u32 %v518, 7
          %v520 = vsub.s32 0, %v519
          %v521 = vrot.slane %v516, %v520
          %v522 = vlaneseq
          %v523 = vshrl.u32 %v522, 7
          %v524 = vsub.s32 1, %v523
          %v525 = vrot.slane %v516, %v524
          %vm528 = vcmask 1040384
          %v529 = vsel %vm528, %v521, 0.0
          %v530 = vsel %vm528, %v525, 0.0
          %v531 = vadd.f32 %v529, %v530
          %532 = vadd.xlane.f32.xlu0 %v531
          %v533 = vpop.xlane.xlu0 %532
          %vm534 = vcmask 0
          %535 = vst.msk [vmem:[%s334] sm:$0x1] %vm534, %v533
          %v536 = vld [vmem:[#allocation3] sm:$0xff]
          %v538 = vcombine.high %v536, %v536
          %v540 = vsel %vm383, %v536, 0.0
          %v541 = vsel %vm383, %v538, 0.0
          %v542 = vadd.f32 %v540, %v541
          %543 = vadd.xlane.f32.xlu0 %v542
          %v544 = vpop.xlane.xlu0 %543
          %545 = vst.msk [vmem:[%s338] sm:$0xf] %vm511, %v544
          %v546 = vld [vmem:[#allocation4] sm:$0xff]
          %v548 = vcombine.high %v546, %v546
          %v550 = vsel %vm383, %v546, 0.0
          %v551 = vsel %vm383, %v548, 0.0
          %v552 = vadd.f32 %v550, %v551
          %553 = vadd.xlane.f32.xlu0 %v552
          %v554 = vpop.xlane.xlu0 %553
          %555 = vst.msk [vmem:[%s342] sm:$0xf] %vm511, %v554
          %v556 = vld [vmem:[#allocation5] sm:$0xf]
          %557 = vst.msk [vmem:[%s346] sm:$0xf] %vm511, %v556
        $region44: #{tpu_custom_call.1} parent=31 // pred_fallthru
          _
        %p558 = scmp.lt.s32.totalorder %s25, 1
        %s559 = scalar_select %p558, %s25, 1
        %s560 = scalar_lea.vmem %s3, %s559
        %p561 = scmp.lt.s32.totalorder %s25, 1
        %s562 = scalar_select %p561, %s25, 1
        %s563 = smul.addr %s562, 4
        %s564 = scalar_lea.vmem %s4, %s563
        %p565 = scmp.lt.s32.totalorder %s25, 1
        %s566 = scalar_select %p565, %s25, 1
        %s567 = smul.addr %s566, 4
        %s568 = scalar_lea.vmem %s5, %s567
        %p569 = scmp.lt.s32.totalorder %s25, 1
        %s570 = scalar_select %p569, %s25, 1
        %s571 = smul.addr %s570, 4
        %s572 = scalar_lea.vmem %s6, %s571
        // Predicated region
        $region45: #{tpu_custom_call.1} parent=31 // pred_check
          %p573 = pneg %p128
        $region46: #{tpu_custom_call.1} parent=31 // pred_check_branch
          %575 = sbr.rel (%p573) target = $region48
        $region47: #{tpu_custom_call.1} parent=31 // pred_region
          _
        $region48: #{tpu_custom_call.1} parent=31 // pred_fallthru
          _
        // Predicated region
        $region49: #{tpu_custom_call.1} parent=31 // pred_check
          %p576 = pneg %p154
        $region50: #{tpu_custom_call.1} parent=31 // pred_check_branch
          %578 = sbr.rel (%p576) target = $region52
        $region51: #{tpu_custom_call.1} parent=31 // pred_region
          _
        $region52: #{tpu_custom_call.1} parent=31 // pred_fallthru
          _
        // Predicated region
        $region53: #{tpu_custom_call.1} parent=31 // pred_check
          %p579 = pneg %p180
        $region54: #{tpu_custom_call.1} parent=31 // pred_check_branch
          %581 = sbr.rel (%p579) target = $region56
        $region55: #{tpu_custom_call.1} parent=31 // pred_region
          _
        $region56: #{tpu_custom_call.1} parent=31 // pred_fallthru
          _
        // Predicated region
        $region57: #{tpu_custom_call.1} parent=31 // pred_check
          %p582 = pneg %p206
        $region58: #{tpu_custom_call.1} parent=31 // pred_check_branch
          %584 = sbr.rel (%p582) target = $region60
        $region59: #{tpu_custom_call.1} parent=31 // pred_region
          _
        $region60: #{tpu_custom_call.1} parent=31 // pred_fallthru
          _
      $region32: #{tpu_custom_call.1} parent=5 // pred_fallthru
        _
      %p585 = scmp.le.s32.totalorder 2, %s16
      // Predicated region
      $region61: #{tpu_custom_call.1} parent=5 // pred_check
        %p586 = pneg %p585
      $region62: #{tpu_custom_call.1} parent=5 // pred_check_branch
        %588 = sbr.rel (%p586) target = $region64
      $region63: #{tpu_custom_call.1} parent=5 // pred_region
        %s589 = ssub.s32 %s16, 2
        // Predicated region
        $region65: #{tpu_custom_call.1} parent=63 // pred_check
          %p590 = pneg %p134
        $region66: #{tpu_custom_call.1} parent=63 // pred_check_branch
          %592 = sbr.rel (%p590) target = $region68
        $region67: #{tpu_custom_call.1} parent=63 // pred_region
          %p593 = scmp.lt.s32.totalorder %s27, 1
          %s594 = scalar_select %p593, %s27, 1
          %s595 = scalar_lea.vmem %s3, %s594
        $region68: #{tpu_custom_call.1} parent=63 // pred_fallthru
          _
        // Predicated region
        $region69: #{tpu_custom_call.1} parent=63 // pred_check
          %p596 = pneg %p160
        $region70: #{tpu_custom_call.1} parent=63 // pred_check_branch
          %598 = sbr.rel (%p596) target = $region72
        $region71: #{tpu_custom_call.1} parent=63 // pred_region
          %p599 = scmp.lt.s32.totalorder %s27, 1
          %s600 = scalar_select %p599, %s27, 1
          %s601 = smul.addr %s600, 4
          %s602 = scalar_lea.vmem %s4, %s601
        $region72: #{tpu_custom_call.1} parent=63 // pred_fallthru
          _
        // Predicated region
        $region73: #{tpu_custom_call.1} parent=63 // pred_check
          %p603 = pneg %p186
        $region74: #{tpu_custom_call.1} parent=63 // pred_check_branch
          %605 = sbr.rel (%p603) target = $region76
        $region75: #{tpu_custom_call.1} parent=63 // pred_region
          %p606 = scmp.lt.s32.totalorder %s27, 1
          %s607 = scalar_select %p606, %s27, 1
          %s608 = smul.addr %s607, 4
          %s609 = scalar_lea.vmem %s5, %s608
        $region76: #{tpu_custom_call.1} parent=63 // pred_fallthru
          _
        // Predicated region
        $region77: #{tpu_custom_call.1} parent=63 // pred_check
          %p610 = pneg %p212
        $region78: #{tpu_custom_call.1} parent=63 // pred_check_branch
          %612 = sbr.rel (%p610) target = $region80
        $region79: #{tpu_custom_call.1} parent=63 // pred_region
          %p613 = scmp.lt.s32.totalorder %s27, 1
          %s614 = scalar_select %p613, %s27, 1
          %s615 = smul.addr %s614, 4
          %s616 = scalar_lea.vmem %s6, %s615
        $region80: #{tpu_custom_call.1} parent=63 // pred_fallthru
          _
      $region64: #{tpu_custom_call.1} parent=5 // pred_fallthru
        _
    $region6: #{tpu_custom_call.1} parent=1 // loop_footer
      %s20 = sadd.s32 1, %s16
    $region7: #{tpu_custom_call.1} parent=1 // loop_footer_branch
      %15 = sbr.rel target = $region3
    $region8: #{tpu_custom_call.1} parent=1 // loop_exit
      _
    %617 = vsyncpa [#allocation7], 1
    %s618 = scalar_lea.sflag [#allocation7], 1
    %619 = vsyncpa %s618, 1

</llo_original>
